<compile_context>
chip_gen: v6e
topology: v6e:2x2x1
jax: 0.10.0
libtpu: 0.0.40
codegen_flags: <defaults>
</compile_context>

<pallas_src>
import functools
from typing import NamedTuple

import jax
import jax.numpy as jnp
from jax.experimental import pallas as pl
from jax.experimental.pallas import tpu as pltpu


def _round_up(v, m):
    return ((v + m - 1) // m) * m


class FusedParams(NamedTuple):
    w: jax.Array          # (C, KPc + KPb) fused, lane-padded weight (bf16 by default)
    b_cls: jax.Array      # (1, KPc) f32, lane-padded cls bias
    b_bbox: jax.Array     # (1, KPb) f32, lane-padded bbox bias
    num_classes: int      # K  (unpadded cls width)
    num_bbox_outputs: int  # 4K (unpadded bbox width)


def fuse_fast_rcnn_params(w_cls, b_cls, w_bbox, b_bbox, *, param_dtype=jnp.bfloat16):
    """One-time preprocessing (call at init, NOT per forward).

    w_cls: (C, K); b_cls: (K,) or (1, K); w_bbox: (C, 4K); b_bbox: (4K,) or (1, 4K).
    Pads each head's output width up to a multiple of 128 lanes, fuses the two
    weights into one (C, KPc+KPb) matrix cast to `param_dtype`, and keeps the
    biases in f32 (they are added onto the f32 MXU accumulator).
    Use param_dtype=jnp.float32 for bit-exact f32 parity with torch.
    """
    C, K = w_cls.shape
    K4 = w_bbox.shape[1]
    assert w_bbox.shape[0] == C
    KPc = _round_up(K, 128)
    KPb = _round_up(K4, 128)
    w = jnp.concatenate(
        [jnp.pad(w_cls, ((0, 0), (0, KPc - K))),
         jnp.pad(w_bbox, ((0, 0), (0, KPb - K4)))],
        axis=1).astype(param_dtype)
    bc = jnp.pad(jnp.reshape(b_cls, (1, K)), ((0, 0), (0, KPc - K))).astype(jnp.float32)
    bb = jnp.pad(jnp.reshape(b_bbox, (1, K4)), ((0, 0), (0, KPb - K4))).astype(jnp.float32)
    return FusedParams(w=w, b_cls=bc, b_bbox=bb, num_classes=K, num_bbox_outputs=K4)


def _predictor_kernel(x_ref, w_ref, bc_ref, bb_ref, oc_ref, ob_ref, *, kpc):
    # One fused matmul: (TM, C) @ (C, KPc+KPb) -> f32 accumulator.
    x = x_ref[...]
    if x.dtype != w_ref.dtype:
        x = x.astype(w_ref.dtype)   # small per-tile cast only; weights are pre-cast
    acc = jnp.dot(x, w_ref[...], preferred_element_type=jnp.float32)
    # Split at a 128-lane boundary -> both stores stay lane-dense / unmasked.
    oc_ref[...] = (acc[:, :kpc] + bc_ref[...]).astype(oc_ref.dtype)
    ob_ref[...] = (acc[:, kpc:] + bb_ref[...]).astype(ob_ref.dtype)


def fast_rcnn_predictor(x, fused: FusedParams, *, block_rows=512,
                        out_dtype=None, strip_padding=True):
    """x: (N, C). Returns (scores (N, K), bbox_deltas (N, 4K)).

    With strip_padding=False, returns the lane-padded (NP, KPc) / (NP, KPb)
    outputs directly (no post-kernel copies) for downstream fusion.
    """
    N, C = x.shape
    KPc = fused.b_cls.shape[1]
    KPb = fused.b_bbox.shape[1]
    KP = KPc + KPb
    assert fused.w.shape == (C, KP)
    if out_dtype is None:
        out_dtype = x.dtype

    # Row tile: multiple of 8 sublanes, capped at block_rows. Prefer >= 2 grid
    # steps (keeps both v7x TensorCores fed); v5e (16 MiB scoped VMEM) stays
    # comfortable at tm <= 512 with f32 x/out tiles + bf16 resident weights.
    tm = min(block_rows, _round_up(N, 8))
    if _round_up(N, tm) // tm < 2 and tm > 128:
        tm = max(128, _round_up(-(-N // 2), 8))
    NP = _round_up(N, tm)
    xp = jnp.pad(x, ((0, NP - N), (0, 0))) if NP != N else x

    kernel = functools.partial(_predictor_kernel, kpc=KPc)

    def _run(single_buffer_resident):
        # Resident (constant index-map) operands don't need a second buffer.
        res_kw = (dict(pipeline_mode=pl.Buffered(1))
                  if single_buffer_resident else {})
        return pl.pallas_call(
            kernel,
            out_shape=(jax.ShapeDtypeStruct((NP, KPc), out_dtype),
                       jax.ShapeDtypeStruct((NP, KPb), out_dtype)),
            grid=(NP // tm,),
            in_specs=[
                pl.BlockSpec((tm, C), lambda i: (i, 0)),              # x tile, pipelined
                pl.BlockSpec((C, KP), lambda i: (0, 0), **res_kw),    # fused W, resident
                pl.BlockSpec((1, KPc), lambda i: (0, 0), **res_kw),   # cls bias, resident
                pl.BlockSpec((1, KPb), lambda i: (0, 0), **res_kw),   # bbox bias, resident
            ],
            out_specs=[
                pl.BlockSpec((tm, KPc), lambda i: (i, 0)),
                pl.BlockSpec((tm, KPb), lambda i: (i, 0)),
            ],
            compiler_params=pltpu.CompilerParams(
                dimension_semantics=("parallel",)),
        )(xp, fused.w, fused.b_cls, fused.b_bbox)

    try:
        y_cls, y_bbox = _run(True)
    except Exception:  # jax version without pipeline_mode support -> default buffering
        y_cls, y_bbox = _run(False)

    if not strip_padding:
        return y_cls, y_bbox
    K, K4 = fused.num_classes, fused.num_bbox_outputs
    return y_cls[:N, :K], y_bbox[:N, :K4]


def init_params(key, in_channels, num_classes, dtype=jnp.float32):
    """Deterministic init mimicking nn.Linear default (uniform +/- 1/sqrt(fan_in)).

    Weights are returned in (C, out) layout (transposed vs. torch)."""
    k1, k2, k3, k4 = jax.random.split(key, 4)
    bound = 1.0 / jnp.sqrt(jnp.asarray(in_channels, dtype))
    w_cls = jax.random.uniform(k1, (in_channels, num_classes), dtype, -bound, bound)
    b_cls = jax.random.uniform(k2, (1, num_classes), dtype, -bound, bound)
    w_bbox = jax.random.uniform(k3, (in_channels, num_classes * 4), dtype, -bound, bound)
    b_bbox = jax.random.uniform(k4, (1, num_classes * 4), dtype, -bound, bound)
    return w_cls, b_cls, w_bbox, b_bbox


if __name__ == "__main__":
    # Small, module-consistent shapes: N ROIs x in_channels features.
    N = 10
    in_channels = 32
    num_classes = 8

    key = jax.random.PRNGKey(0)
    kx, kp = jax.random.split(key)
    x = jax.random.normal(kx, (N, in_channels), jnp.float32)
    w_cls, b_cls, w_bbox, b_bbox = init_params(kp, in_channels, num_classes)

    # One-time (hoisted) parameter fusion / padding / cast.
    fused = fuse_fast_rcnn_params(w_cls, b_cls, w_bbox, b_bbox)

    scores, bbox_deltas = fast_rcnn_predictor(x, fused)
    jax.block_until_ready((scores, bbox_deltas))

    # Reference check against plain JAX (same math as the two nn.Linear heads).
    # Kernel uses bf16 weights / x with f32 accumulation, so allow bf16-level error.
    ref_scores = x @ w_cls + b_cls
    ref_bbox = x @ w_bbox + b_bbox
    assert scores.shape == (N, num_classes)
    assert bbox_deltas.shape == (N, num_classes * 4)
    assert jnp.allclose(scores, ref_scores, atol=2e-2, rtol=2e-2)
    assert jnp.allclose(bbox_deltas, ref_bbox, atol=2e-2, rtol=2e-2)

    print("KERNEL_OK")
</pallas_src>

<mosaic_0001>
module attributes {stable_mosaic.version = 11 : i64} {
  func.func @_predictor_kernel(%arg0: i32, %arg1: memref<16x32xf32, #tpu.memory_space<vmem>>, %arg2: memref<32x256xbf16, #tpu.memory_space<vmem>>, %arg3: memref<1x128xf32, #tpu.memory_space<vmem>>, %arg4: memref<1x128xf32, #tpu.memory_space<vmem>>, %arg5: memref<16x128xf32, #tpu.memory_space<vmem>>, %arg6: memref<16x128xf32, #tpu.memory_space<vmem>>) attributes {dimension_semantics = [#tpu.dimension_semantics<parallel>], iteration_bounds = array<i64: 1>, scalar_prefetch = 0 : i64, scratch_operands = 0 : i64, tpu.core_type = #tpu.core_type<tc>, window_params = [{transform_indices = @transform_0, window_bounds = array<i64: 16, 32>}, {pipeline_mode = #tpu.pipeline_mode<synchronous>, transform_indices = @transform_1, window_bounds = array<i64: 32, 256>}, {pipeline_mode = #tpu.pipeline_mode<synchronous>, transform_indices = @transform_2, window_bounds = array<i64: 1, 128>}, {pipeline_mode = #tpu.pipeline_mode<synchronous>, transform_indices = @transform_3, window_bounds = array<i64: 1, 128>}, {transform_indices = @transform_4, window_bounds = array<i64: 16, 128>}, {transform_indices = @transform_5, window_bounds = array<i64: 16, 128>}]} {
    %c0 = arith.constant 0 : index
    %c0_0 = arith.constant 0 : index
    %0 = vector.load %arg1[%c0, %c0_0] : memref<16x32xf32, #tpu.memory_space<vmem>>, vector<16x32xf32>
    %1 = arith.truncf %0 : vector<16x32xf32> to vector<16x32xbf16>
    %c0_1 = arith.constant 0 : index
    %c0_2 = arith.constant 0 : index
    %2 = vector.load %arg2[%c0_1, %c0_2] : memref<32x256xbf16, #tpu.memory_space<vmem>>, vector<32x256xbf16>
    %cst = arith.constant dense<0.000000e+00> : vector<16x256xf32>
    %3 = tpu.matmul %1, %2, %cst {dimension_numbers = #tpu.dot_dimension_numbers<[1], [0], [0], [1], [0, 0, 1, 1], [], []>} : vector<16x32xbf16>, vector<32x256xbf16>, vector<16x256xf32> -> vector<16x256xf32>
    %4 = vector.extract_strided_slice %3 {offsets = [0, 0], sizes = [16, 128], strides = [1, 1]} : vector<16x256xf32> to vector<16x128xf32>
    %c0_3 = arith.constant 0 : index
    %c0_4 = arith.constant 0 : index
    %5 = vector.load %arg3[%c0_3, %c0_4] : memref<1x128xf32, #tpu.memory_space<vmem>>, vector<1x128xf32>
    %6 = vector.broadcast %5 : vector<1x128xf32> to vector<16x128xf32>
    %7 = arith.addf %4, %6 : vector<16x128xf32>
    %c0_5 = arith.constant 0 : index
    %c0_6 = arith.constant 0 : index
    %8 = vector.load %arg5[%c0_5, %c0_6] : memref<16x128xf32, #tpu.memory_space<vmem>>, vector<16x128xf32>
    tpu.vector_store %arg5[%c0_5, %c0_6], %7 {strides = array<i32>} : memref<16x128xf32, #tpu.memory_space<vmem>>, vector<16x128xf32>,
    %9 = vector.extract_strided_slice %3 {offsets = [0, 128], sizes = [16, 128], strides = [1, 1]} : vector<16x256xf32> to vector<16x128xf32>
    %c0_7 = arith.constant 0 : index
    %c0_8 = arith.constant 0 : index
    %10 = vector.load %arg4[%c0_7, %c0_8] : memref<1x128xf32, #tpu.memory_space<vmem>>, vector<1x128xf32>
    %11 = vector.broadcast %10 : vector<1x128xf32> to vector<16x128xf32>
    %12 = arith.addf %9, %11 : vector<16x128xf32>
    %c0_9 = arith.constant 0 : index
    %c0_10 = arith.constant 0 : index
    %13 = vector.load %arg6[%c0_9, %c0_10] : memref<16x128xf32, #tpu.memory_space<vmem>>, vector<16x128xf32>
    tpu.vector_store %arg6[%c0_9, %c0_10], %12 {strides = array<i32>} : memref<16x128xf32, #tpu.memory_space<vmem>>, vector<16x128xf32>,
    return
  }
  func.func @transform_0(%arg0: i32) -> (i32, i32) {
    %c0_i32 = arith.constant 0 : i32
    %c0_i32_0 = arith.constant 0 : i32
    return %arg0, %c0_i32 : i32, i32
  }
  func.func @transform_1(%arg0: i32) -> (i32, i32) {
    %c0_i32 = arith.constant 0 : i32
    %c0_i32_0 = arith.constant 0 : i32
    %c0_i32_1 = arith.constant 0 : i32
    return %c0_i32, %c0_i32_0 : i32, i32
  }
  func.func @transform_2(%arg0: i32) -> (i32, i32) {
    %c0_i32 = arith.constant 0 : i32
    %c0_i32_0 = arith.constant 0 : i32
    %c0_i32_1 = arith.constant 0 : i32
    return %c0_i32, %c0_i32_0 : i32, i32
  }
  func.func @transform_3(%arg0: i32) -> (i32, i32) {
    %c0_i32 = arith.constant 0 : i32
    %c0_i32_0 = arith.constant 0 : i32
    %c0_i32_1 = arith.constant 0 : i32
    return %c0_i32, %c0_i32_0 : i32, i32
  }
  func.func @transform_4(%arg0: i32) -> (i32, i32) {
    %c0_i32 = arith.constant 0 : i32
    %c0_i32_0 = arith.constant 0 : i32
    return %arg0, %c0_i32 : i32, i32
  }
  func.func @transform_5(%arg0: i32) -> (i32, i32) {
    %c0_i32 = arith.constant 0 : i32
    %c0_i32_0 = arith.constant 0 : i32
    return %arg0, %c0_i32 : i32, i32
  }
}

module attributes {stable_mosaic.version = 11 : i64} {
  func.func @_predictor_kernel(%arg0: i32, %arg1: memref<16x32xf32, #tpu.memory_space<vmem>>, %arg2: memref<32x256xbf16, #tpu.memory_space<vmem>>, %arg3: memref<1x128xf32, #tpu.memory_space<vmem>>, %arg4: memref<1x128xf32, #tpu.memory_space<vmem>>, %arg5: memref<16x128xf32, #tpu.memory_space<vmem>>, %arg6: memref<16x128xf32, #tpu.memory_space<vmem>>) attributes {dimension_semantics = [#tpu.dimension_semantics<parallel>], iteration_bounds = array<i64: 1>, scalar_prefetch = 0 : i64, scratch_operands = 0 : i64, tpu.core_type = #tpu.core_type<tc>, window_params = [{transform_indices = @transform_0, window_bounds = array<i64: 16, 32>}, {pipeline_mode = #tpu.pipeline_mode<synchronous>, transform_indices = @transform_1, window_bounds = array<i64: 32, 256>}, {pipeline_mode = #tpu.pipeline_mode<synchronous>, transform_indices = @transform_2, window_bounds = array<i64: 1, 128>}, {pipeline_mode = #tpu.pipeline_mode<synchronous>, transform_indices = @transform_3, window_bounds = array<i64: 1, 128>}, {transform_indices = @transform_4, window_bounds = array<i64: 16, 128>}, {transform_indices = @transform_5, window_bounds = array<i64: 16, 128>}]} {
    %c0 = arith.constant 0 : index
    %c0_0 = arith.constant 0 : index
    %0 = vector.load %arg1[%c0, %c0_0] : memref<16x32xf32, #tpu.memory_space<vmem>>, vector<16x32xf32>
    %1 = arith.truncf %0 : vector<16x32xf32> to vector<16x32xbf16>
    %c0_1 = arith.constant 0 : index
    %c0_2 = arith.constant 0 : index
    %2 = vector.load %arg2[%c0_1, %c0_2] : memref<32x256xbf16, #tpu.memory_space<vmem>>, vector<32x256xbf16>
    %cst = arith.constant dense<0.000000e+00> : vector<16x256xf32>
    %3 = tpu.matmul %1, %2, %cst {dimension_numbers = #tpu.dot_dimension_numbers<[1], [0], [0], [1], [0, 0, 1, 1], [], []>} : vector<16x32xbf16>, vector<32x256xbf16>, vector<16x256xf32> -> vector<16x256xf32>
    %4 = vector.extract_strided_slice %3 {offsets = [0, 0], sizes = [16, 128], strides = [1, 1]} : vector<16x256xf32> to vector<16x128xf32>
    %c0_3 = arith.constant 0 : index
    %c0_4 = arith.constant 0 : index
    %5 = vector.load %arg3[%c0_3, %c0_4] : memref<1x128xf32, #tpu.memory_space<vmem>>, vector<1x128xf32>
    %6 = vector.broadcast %5 : vector<1x128xf32> to vector<16x128xf32>
    %7 = arith.addf %4, %6 : vector<16x128xf32>
    %c0_5 = arith.constant 0 : index
    %c0_6 = arith.constant 0 : index
    %8 = vector.load %arg5[%c0_5, %c0_6] : memref<16x128xf32, #tpu.memory_space<vmem>>, vector<16x128xf32>
    tpu.vector_store %arg5[%c0_5, %c0_6], %7 {strides = array<i32>} : memref<16x128xf32, #tpu.memory_space<vmem>>, vector<16x128xf32>,
    %9 = vector.extract_strided_slice %3 {offsets = [0, 128], sizes = [16, 128], strides = [1, 1]} : vector<16x256xf32> to vector<16x128xf32>
    %c0_7 = arith.constant 0 : index
    %c0_8 = arith.constant 0 : index
    %10 = vector.load %arg4[%c0_7, %c0_8] : memref<1x128xf32, #tpu.memory_space<vmem>>, vector<1x128xf32>
    %11 = vector.broadcast %10 : vector<1x128xf32> to vector<16x128xf32>
    %12 = arith.addf %9, %11 : vector<16x128xf32>
    %c0_9 = arith.constant 0 : index
    %c0_10 = arith.constant 0 : index
    %13 = vector.load %arg6[%c0_9, %c0_10] : memref<16x128xf32, #tpu.memory_space<vmem>>, vector<16x128xf32>
    tpu.vector_store %arg6[%c0_9, %c0_10], %12 {strides = array<i32>} : memref<16x128xf32, #tpu.memory_space<vmem>>, vector<16x128xf32>,
    return
  }
  func.func @transform_0(%arg0: i32) -> (i32, i32) {
    %c0_i32 = arith.constant 0 : i32
    %c0_i32_0 = arith.constant 0 : i32
    return %arg0, %c0_i32 : i32, i32
  }
  func.func @transform_1(%arg0: i32) -> (i32, i32) {
    %c0_i32 = arith.constant 0 : i32
    %c0_i32_0 = arith.constant 0 : i32
    %c0_i32_1 = arith.constant 0 : i32
    return %c0_i32, %c0_i32_0 : i32, i32
  }
  func.func @transform_2(%arg0: i32) -> (i32, i32) {
    %c0_i32 = arith.constant 0 : i32
    %c0_i32_0 = arith.constant 0 : i32
    %c0_i32_1 = arith.constant 0 : i32
    return %c0_i32, %c0_i32_0 : i32, i32
  }
  func.func @transform_3(%arg0: i32) -> (i32, i32) {
    %c0_i32 = arith.constant 0 : i32
    %c0_i32_0 = arith.constant 0 : i32
    %c0_i32_1 = arith.constant 0 : i32
    return %c0_i32, %c0_i32_0 : i32, i32
  }
  func.func @transform_4(%arg0: i32) -> (i32, i32) {
    %c0_i32 = arith.constant 0 : i32
    %c0_i32_0 = arith.constant 0 : i32
    return %arg0, %c0_i32 : i32, i32
  }
  func.func @transform_5(%arg0: i32) -> (i32, i32) {
    %c0_i32 = arith.constant 0 : i32
    %c0_i32_0 = arith.constant 0 : i32
    return %arg0, %c0_i32 : i32, i32
  }
}

</mosaic_0001>

<llo_original>
// kernel: tpu_custom_call.1
$region0: #{tpu_custom_call.1}
  #allocation0 [shape = 'u32[]', space=smem, size = 0x4, offset = 0x4, fixed_abs, tag = 'smem constant byte address 0x4 - core index']
  #allocation1 [shape = 'u32[144,128]{1,0:T(1,128)}', space=vmem, size = 0x12000, scoped, tag = 'internal scratch']
  %s0 = inlined_call_operand.hbm [shape: f32[16,32], index: 0, kind: input, shape index: {}]
  %s1 = inlined_call_operand.hbm [shape: bf16[32,256], index: 1, kind: input, shape index: {}]
  %s2 = inlined_call_operand.vmem [shape: f32[1,128], index: 2, kind: input, shape index: {}]
  %s3 = inlined_call_operand.vmem [shape: f32[1,128], index: 3, kind: input, shape index: {}]
  %s4 = inlined_call_operand.hbm [shape: f32[16,128], index: 4, kind: output, shape index: {0}]
  %s5 = inlined_call_operand.hbm [shape: f32[16,128], index: 5, kind: output, shape index: {1}]
  %6 = xla_tuple %s4, %s5
  %s7 = sld [smem:[#allocation0]]
  $region42: #{tpu_custom_call.1} parent=0
    _
  %s9 = ssub.s32 1, %s7
  %s10 = scalar_select 0, %s9, %s7
  $region1: #{tpu_custom_call.1} parent=0
    #allocation2 [shape = 'u8[8192]{0}', space=vmem, size = 0x2000, scoped, tag = 'input window, operand 0, single buffered']
    #allocation3 [shape = 's32[1]{0}', space=sflag, size = 0x4, scoped, tag = 'scoped memory for tpu_custom_call.1']
    #allocation4 [shape = 's32[1]{0}', space=sflag, size = 0x4, scoped, tag = 'scoped memory for tpu_custom_call.1']
    #allocation5 [shape = 'u8[16384]{0}', space=vmem, size = 0x4000, scoped, tag = 'input window, operand 1, single buffered']
    #allocation6 [shape = 's32[1]{0}', space=sflag, size = 0x4, scoped, tag = 'scoped memory for tpu_custom_call.1']
    #allocation7 [shape = 'u8[8192]{0}', space=vmem, size = 0x2000, scoped, tag = 'output window, operand 0, single buffered']
    #allocation8 [shape = 'u8[8192]{0}', space=vmem, size = 0x2000, scoped, tag = 'output window, operand 1, single buffered']
    #allocation9 [shape = 's32[1]{0}', space=sflag, size = 0x4, scoped, tag = 'scoped memory for tpu_custom_call.1']
    %11 = vsyncpa [#allocation3], 0
    %12 = vsyncpa [#allocation6], 0
    %13 = vsyncpa [#allocation4], 0
    %14 = vsyncpa [#allocation9], 0
    // Predicated region
    $region2: #{tpu_custom_call.1} parent=1 // pred_check
      _
    $region3: #{tpu_custom_call.1} parent=1 // pred_check_branch
      %16 = sbr.rel (0) target = $region5
    $region4: #{tpu_custom_call.1} parent=1 // pred_region
      %s18 = ssub.s32 256, 256
      %19 = vsyncadd [#allocation3], %s18
      %s20 = sshll.u32 [#allocation2], 4
      %s21 = int_to_ptr.vmem [resolvable:$true] %s20
      %26 = dma.hbm_to_vmem [thread:$0]  %s0, 256, %s21, [#allocation3], 128, 128, 8
    $region5: #{tpu_custom_call.1} parent=1 // pred_fallthru
      _
    // Predicated region
    $region6: #{tpu_custom_call.1} parent=1 // pred_check
      _
    $region7: #{tpu_custom_call.1} parent=1 // pred_check_branch
      %28 = sbr.rel (0) target = $region9
    $region8: #{tpu_custom_call.1} parent=1 // pred_region
      %s30 = ssub.s32 512, 512
      %31 = vsyncadd [#allocation6], %s30
      %s32 = sshll.u32 [#allocation5], 4
      %s33 = int_to_ptr.vmem [resolvable:$true] %s32
      %38 = dma.hbm_to_vmem [thread:$0]  %s1, 512, %s33, [#allocation6], 128, 128, 8
    $region9: #{tpu_custom_call.1} parent=1 // pred_fallthru
      _
    // Predicated region
    $region10: #{tpu_custom_call.1} parent=1 // pred_check
      _
    $region11: #{tpu_custom_call.1} parent=1 // pred_check_branch
      %40 = sbr.rel (0) target = $region13
    $region12: #{tpu_custom_call.1} parent=1 // pred_region
      _
    $region13: #{tpu_custom_call.1} parent=1 // pred_fallthru
      _
    // Predicated region
    $region14: #{tpu_custom_call.1} parent=1 // pred_check
      _
    $region15: #{tpu_custom_call.1} parent=1 // pred_check_branch
      %42 = sbr.rel (0) target = $region17
    $region16: #{tpu_custom_call.1} parent=1 // pred_region
      _
    $region17: #{tpu_custom_call.1} parent=1 // pred_fallthru
      _
    // Predicated region
    $region18: #{tpu_custom_call.1} parent=1 // pred_check
      _
    $region19: #{tpu_custom_call.1} parent=1 // pred_check_branch
      %44 = sbr.rel (0) target = $region21
    $region20: #{tpu_custom_call.1} parent=1 // pred_region
      %45 = dma.done [#allocation3], 256
    $region21: #{tpu_custom_call.1} parent=1 // pred_fallthru
      _
    // Predicated region
    $region22: #{tpu_custom_call.1} parent=1 // pred_check
      _
    $region23: #{tpu_custom_call.1} parent=1 // pred_check_branch
      %47 = sbr.rel (0) target = $region25
    $region24: #{tpu_custom_call.1} parent=1 // pred_region
      %48 = dma.done [#allocation6], 512
    $region25: #{tpu_custom_call.1} parent=1 // pred_fallthru
      _
    %v50 = vld [vmem:[#allocation2] sm:$0xff]
    %v51 = vld [vmem:[#allocation2 + $0x8] sm:$0xff]
    %v52 = vpack.c.bf16 %v51, %v50
    %v53 = vld [vmem:[#allocation5] sm:$0xff]
    %v54 = vld [vmem:[#allocation5 + $0x8] sm:$0xff]
    %v55 = vld [vmem:[#allocation5 + $0x10] sm:$0xff]
    %v56 = vld [vmem:[#allocation5 + $0x18] sm:$0xff]
    %v61 = vunpack.c.l.b16 %v53
    %v62 = vunpack.c.h.b16 %v53
    %v63 = vunpack.c.l.b16 %v54
    %v64 = vunpack.c.h.b16 %v54
    %v65 = vunpack.c.l.b16 %v55
    %v66 = vunpack.c.h.b16 %v55
    %v67 = vunpack.c.l.b16 %v56
    %v68 = vunpack.c.h.b16 %v56
    %v69 = vpack.c.b16 %v63, %v61
    %v70 = vpack.c.b16 %v64, %v62
    %v71 = vpack.c.b16 %v67, %v65
    %v72 = vpack.c.b16 %v68, %v66
    %vm77 = vcmask 261120
    %v79 = vsel %vm77, %v52, 0
    %81 = vmatprep.subr.bf16.mxu0 0
    %82 = vmatpush1.bf16.msra.mxu0 0
    %83 = vmatprep.subr.bf16.mxu0 0
    %84 = vmatpush1.bf16.msra.mxu0 0
    %85 = vmatprep.subr.bf16.mxu0 0
    %86 = vmatpush1.bf16.msra.mxu0 0
    %87 = vmatprep.subr.bf16.mxu0 0
    %88 = vmatpush1.bf16.msra.mxu0 0
    %89 = vmatprep.subr.bf16.mxu0 0
    %90 = vmatpush1.bf16.msra.mxu0 0
    %91 = vmatprep.subr.bf16.mxu0 0
    %92 = vmatpush1.bf16.msra.mxu0 0
    %93 = vmatprep.subr.bf16.mxu0 %v72
    %94 = vmatpush1.bf16.msra.mxu0 %v71
    %95 = vmatprep.subr.bf16.mxu0 %v70
    %96 = vmatpush1.bf16.msra.mxu0 %v69
    %97 = vmatprep.subr.bf16.mxu0 0
    %98 = vmatpush2.bf16.msra.mxu0 0
    %99 = vmatprep.subr.bf16.mxu0 0
    %100 = vmatpush2.bf16.msra.mxu0 0
    %101 = vmatprep.subr.bf16.mxu0 0
    %102 = vmatpush2.bf16.msra.mxu0 0
    %103 = vmatprep.subr.bf16.mxu0 0
    %104 = vmatpush2.bf16.msra.mxu0 0
    %105 = vmatprep.subr.bf16.mxu0 0
    %106 = vmatpush2.bf16.msra.mxu0 0
    %107 = vmatprep.subr.bf16.mxu0 0
    %108 = vmatpush2.bf16.msra.mxu0 0
    %109 = vmatprep.subr.bf16.mxu0 0
    %110 = vmatpush2.bf16.msra.mxu0 0
    %111 = vmatprep.subr.bf16.mxu0 0
    %112 = vmatpush2.bf16.msra.mxu0 0
    %113 = vmatprep.mubr.bf16.mxu0 0
    %114 = vmatmul.mubr.bf16.gmra.mxu0 %v79
    %v115 = vpop.f32.mrf.mxu0
    %v116 = vadd.f32 0.0, %v115
    %v117 = vpop.f32.mrf.mxu0
    %v118 = vadd.f32 0.0, %v117
    %v119 = vpop.f32.mrf.mxu0
    %v120 = vadd.f32 0.0, %v119
    %v121 = vpop.f32.mrf.mxu0
    %v122 = vadd.f32 0.0, %v121
    %123 = vdwg.mxu0
    %v124 = vld [vmem:[%s2] sm:$0x1]
    %v126 = vlaneseq
    %v127 = vshrl.u32 %v126, 7
    %v128 = vsub.s32 0, %v127
    %v129 = vrot.slane %v124, %v128
    %v131 = vadd.f32 %v116, %v129
    %v132 = vadd.f32 %v120, %v129
    %133 = vst [vmem:[#allocation7] sm:$0xff] %v131
    %134 = vst [vmem:[#allocation7 + $0x8] sm:$0xff] %v132
    %v135 = vld [vmem:[%s3] sm:$0x1]
    %v137 = vlaneseq
    %v138 = vshrl.u32 %v137, 7
    %v139 = vsub.s32 0, %v138
    %v140 = vrot.slane %v135, %v139
    %v142 = vadd.f32 %v118, %v140
    %v143 = vadd.f32 %v122, %v140
    %144 = vst [vmem:[#allocation8] sm:$0xff] %v142
    %145 = vst [vmem:[#allocation8 + $0x8] sm:$0xff] %v143
    // Predicated region
    $region26: #{tpu_custom_call.1} parent=1 // pred_check
      _
    $region27: #{tpu_custom_call.1} parent=1 // pred_check_branch
      %147 = sbr.rel (0) target = $region29
    $region28: #{tpu_custom_call.1} parent=1 // pred_region
      %s149 = ssub.s32 256, 256
      %150 = vsyncadd [#allocation4], %s149
      %s151 = sshll.u32 [#allocation7], 4
      %s152 = int_to_ptr.vmem [resolvable:$true] %s151
      %157 = dma.vmem_to_hbm [thread:$0]  %s152, 256, %s4, [#allocation4], 128, 128, 8
    $region29: #{tpu_custom_call.1} parent=1 // pred_fallthru
      _
    // Predicated region
    $region30: #{tpu_custom_call.1} parent=1 // pred_check
      _
    $region31: #{tpu_custom_call.1} parent=1 // pred_check_branch
      %159 = sbr.rel (0) target = $region33
    $region32: #{tpu_custom_call.1} parent=1 // pred_region
      %s161 = ssub.s32 256, 256
      %162 = vsyncadd [#allocation9], %s161
      %s163 = sshll.u32 [#allocation8], 4
      %s164 = int_to_ptr.vmem [resolvable:$true] %s163
      %169 = dma.vmem_to_hbm [thread:$0]  %s164, 256, %s5, [#allocation9], 128, 128, 8
    $region33: #{tpu_custom_call.1} parent=1 // pred_fallthru
      _
    // Predicated region
    $region34: #{tpu_custom_call.1} parent=1 // pred_check
      _
    $region35: #{tpu_custom_call.1} parent=1 // pred_check_branch
      %171 = sbr.rel (0) target = $region37
    $region36: #{tpu_custom_call.1} parent=1 // pred_region
      %172 = dma.done [#allocation4], 256
    $region37: #{tpu_custom_call.1} parent=1 // pred_fallthru
      _
    // Predicated region
    $region38: #{tpu_custom_call.1} parent=1 // pred_check
      _
    $region39: #{tpu_custom_call.1} parent=1 // pred_check_branch
      %174 = sbr.rel (0) target = $region41
    $region40: #{tpu_custom_call.1} parent=1 // pred_region
      %175 = dma.done [#allocation9], 256
    $region41: #{tpu_custom_call.1} parent=1 // pred_fallthru
      _
    %176 = vsyncpa [#allocation3], 1
    %177 = vsyncpa [#allocation6], 1
    %178 = vsyncpa [#allocation4], 1
    %179 = vsyncpa [#allocation9], 1

// kernel: tpu_custom_call.1
$region0: #{tpu_custom_call.1}
  #allocation0 [shape = 'u32[]', space=smem, size = 0x4, offset = 0x4, fixed_abs, tag = 'smem constant byte address 0x4 - core index']
  #allocation1 [shape = 'u32[144,128]{1,0:T(1,128)}', space=vmem, size = 0x12000, scoped, tag = 'internal scratch']
  %s0 = inlined_call_operand.hbm [shape: f32[16,32], index: 0, kind: input, shape index: {}]
  %s1 = inlined_call_operand.hbm [shape: bf16[32,256], index: 1, kind: input, shape index: {}]
  %s2 = inlined_call_operand.vmem [shape: f32[1,128], index: 2, kind: input, shape index: {}]
  %s3 = inlined_call_operand.vmem [shape: f32[1,128], index: 3, kind: input, shape index: {}]
  %s4 = inlined_call_operand.hbm [shape: f32[16,128], index: 4, kind: output, shape index: {0}]
  %s5 = inlined_call_operand.hbm [shape: f32[16,128], index: 5, kind: output, shape index: {1}]
  %6 = xla_tuple %s4, %s5
  %s7 = sld [smem:[#allocation0]]
  $region42: #{tpu_custom_call.1} parent=0
    _
  %s9 = ssub.s32 1, %s7
  %s10 = scalar_select 0, %s9, %s7
  $region1: #{tpu_custom_call.1} parent=0
    #allocation2 [shape = 'u8[8192]{0}', space=vmem, size = 0x2000, scoped, tag = 'input window, operand 0, single buffered']
    #allocation3 [shape = 's32[1]{0}', space=sflag, size = 0x4, scoped, tag = 'scoped memory for tpu_custom_call.1']
    #allocation4 [shape = 's32[1]{0}', space=sflag, size = 0x4, scoped, tag = 'scoped memory for tpu_custom_call.1']
    #allocation5 [shape = 'u8[16384]{0}', space=vmem, size = 0x4000, scoped, tag = 'input window, operand 1, single buffered']
    #allocation6 [shape = 's32[1]{0}', space=sflag, size = 0x4, scoped, tag = 'scoped memory for tpu_custom_call.1']
    #allocation7 [shape = 'u8[8192]{0}', space=vmem, size = 0x2000, scoped, tag = 'output window, operand 0, single buffered']
    #allocation8 [shape = 'u8[8192]{0}', space=vmem, size = 0x2000, scoped, tag = 'output window, operand 1, single buffered']
    #allocation9 [shape = 's32[1]{0}', space=sflag, size = 0x4, scoped, tag = 'scoped memory for tpu_custom_call.1']
    %11 = vsyncpa [#allocation3], 0
    %12 = vsyncpa [#allocation6], 0
    %13 = vsyncpa [#allocation4], 0
    %14 = vsyncpa [#allocation9], 0
    // Predicated region
    $region2: #{tpu_custom_call.1} parent=1 // pred_check
      _
    $region3: #{tpu_custom_call.1} parent=1 // pred_check_branch
      %16 = sbr.rel (0) target = $region5
    $region4: #{tpu_custom_call.1} parent=1 // pred_region
      %s18 = ssub.s32 256, 256
      %19 = vsyncadd [#allocation3], %s18
      %s20 = sshll.u32 [#allocation2], 4
      %s21 = int_to_ptr.vmem [resolvable:$true] %s20
      %26 = dma.hbm_to_vmem [thread:$0]  %s0, 256, %s21, [#allocation3], 128, 128, 8
    $region5: #{tpu_custom_call.1} parent=1 // pred_fallthru
      _
    // Predicated region
    $region6: #{tpu_custom_call.1} parent=1 // pred_check
      _
    $region7: #{tpu_custom_call.1} parent=1 // pred_check_branch
      %28 = sbr.rel (0) target = $region9
    $region8: #{tpu_custom_call.1} parent=1 // pred_region
      %s30 = ssub.s32 512, 512
      %31 = vsyncadd [#allocation6], %s30
      %s32 = sshll.u32 [#allocation5], 4
      %s33 = int_to_ptr.vmem [resolvable:$true] %s32
      %38 = dma.hbm_to_vmem [thread:$0]  %s1, 512, %s33, [#allocation6], 128, 128, 8
    $region9: #{tpu_custom_call.1} parent=1 // pred_fallthru
      _
    // Predicated region
    $region10: #{tpu_custom_call.1} parent=1 // pred_check
      _
    $region11: #{tpu_custom_call.1} parent=1 // pred_check_branch
      %40 = sbr.rel (0) target = $region13
    $region12: #{tpu_custom_call.1} parent=1 // pred_region
      _
    $region13: #{tpu_custom_call.1} parent=1 // pred_fallthru
      _
    // Predicated region
    $region14: #{tpu_custom_call.1} parent=1 // pred_check
      _
    $region15: #{tpu_custom_call.1} parent=1 // pred_check_branch
      %42 = sbr.rel (0) target = $region17
    $region16: #{tpu_custom_call.1} parent=1 // pred_region
      _
    $region17: #{tpu_custom_call.1} parent=1 // pred_fallthru
      _
    // Predicated region
    $region18: #{tpu_custom_call.1} parent=1 // pred_check
      _
    $region19: #{tpu_custom_call.1} parent=1 // pred_check_branch
      %44 = sbr.rel (0) target = $region21
    $region20: #{tpu_custom_call.1} parent=1 // pred_region
      %45 = dma.done [#allocation3], 256
    $region21: #{tpu_custom_call.1} parent=1 // pred_fallthru
      _
    // Predicated region
    $region22: #{tpu_custom_call.1} parent=1 // pred_check
      _
    $region23: #{tpu_custom_call.1} parent=1 // pred_check_branch
      %47 = sbr.rel (0) target = $region25
    $region24: #{tpu_custom_call.1} parent=1 // pred_region
      %48 = dma.done [#allocation6], 512
    $region25: #{tpu_custom_call.1} parent=1 // pred_fallthru
      _
    %v50 = vld [vmem:[#allocation2] sm:$0xff]
    %v51 = vld [vmem:[#allocation2 + $0x8] sm:$0xff]
    %v52 = vpack.c.bf16 %v51, %v50
    %v53 = vld [vmem:[#allocation5] sm:$0xff]
    %v54 = vld [vmem:[#allocation5 + $0x8] sm:$0xff]
    %v55 = vld [vmem:[#allocation5 + $0x10] sm:$0xff]
    %v56 = vld [vmem:[#allocation5 + $0x18] sm:$0xff]
    %v61 = vunpack.c.l.b16 %v53
    %v62 = vunpack.c.h.b16 %v53
    %v63 = vunpack.c.l.b16 %v54
    %v64 = vunpack.c.h.b16 %v54
    %v65 = vunpack.c.l.b16 %v55
    %v66 = vunpack.c.h.b16 %v55
    %v67 = vunpack.c.l.b16 %v56
    %v68 = vunpack.c.h.b16 %v56
    %v69 = vpack.c.b16 %v63, %v61
    %v70 = vpack.c.b16 %v64, %v62
    %v71 = vpack.c.b16 %v67, %v65
    %v72 = vpack.c.b16 %v68, %v66
    %vm77 = vcmask 261120
    %v79 = vsel %vm77, %v52, 0
    %81 = vmatprep.subr.bf16.mxu0 0
    %82 = vmatpush1.bf16.msra.mxu0 0
    %83 = vmatprep.subr.bf16.mxu0 0
    %84 = vmatpush1.bf16.msra.mxu0 0
    %85 = vmatprep.subr.bf16.mxu0 0
    %86 = vmatpush1.bf16.msra.mxu0 0
    %87 = vmatprep.subr.bf16.mxu0 0
    %88 = vmatpush1.bf16.msra.mxu0 0
    %89 = vmatprep.subr.bf16.mxu0 0
    %90 = vmatpush1.bf16.msra.mxu0 0
    %91 = vmatprep.subr.bf16.mxu0 0
    %92 = vmatpush1.bf16.msra.mxu0 0
    %93 = vmatprep.subr.bf16.mxu0 %v72
    %94 = vmatpush1.bf16.msra.mxu0 %v71
    %95 = vmatprep.subr.bf16.mxu0 %v70
    %96 = vmatpush1.bf16.msra.mxu0 %v69
    %97 = vmatprep.subr.bf16.mxu0 0
    %98 = vmatpush2.bf16.msra.mxu0 0
    %99 = vmatprep.subr.bf16.mxu0 0
    %100 = vmatpush2.bf16.msra.mxu0 0
    %101 = vmatprep.subr.bf16.mxu0 0
    %102 = vmatpush2.bf16.msra.mxu0 0
    %103 = vmatprep.subr.bf16.mxu0 0
    %104 = vmatpush2.bf16.msra.mxu0 0
    %105 = vmatprep.subr.bf16.mxu0 0
    %106 = vmatpush2.bf16.msra.mxu0 0
    %107 = vmatprep.subr.bf16.mxu0 0
    %108 = vmatpush2.bf16.msra.mxu0 0
    %109 = vmatprep.subr.bf16.mxu0 0
    %110 = vmatpush2.bf16.msra.mxu0 0
    %111 = vmatprep.subr.bf16.mxu0 0
    %112 = vmatpush2.bf16.msra.mxu0 0
    %113 = vmatprep.mubr.bf16.mxu0 0
    %114 = vmatmul.mubr.bf16.gmra.mxu0 %v79
    %v115 = vpop.f32.mrf.mxu0
    %v116 = vadd.f32 0.0, %v115
    %v117 = vpop.f32.mrf.mxu0
    %v118 = vadd.f32 0.0, %v117
    %v119 = vpop.f32.mrf.mxu0
    %v120 = vadd.f32 0.0, %v119
    %v121 = vpop.f32.mrf.mxu0
    %v122 = vadd.f32 0.0, %v121
    %123 = vdwg.mxu0
    %v124 = vld [vmem:[%s2] sm:$0x1]
    %v126 = vlaneseq
    %v127 = vshrl.u32 %v126, 7
    %v128 = vsub.s32 0, %v127
    %v129 = vrot.slane %v124, %v128
    %v131 = vadd.f32 %v116, %v129
    %v132 = vadd.f32 %v120, %v129
    %133 = vst [vmem:[#allocation7] sm:$0xff] %v131
    %134 = vst [vmem:[#allocation7 + $0x8] sm:$0xff] %v132
    %v135 = vld [vmem:[%s3] sm:$0x1]
    %v137 = vlaneseq
    %v138 = vshrl.u32 %v137, 7
    %v139 = vsub.s32 0, %v138
    %v140 = vrot.slane %v135, %v139
    %v142 = vadd.f32 %v118, %v140
    %v143 = vadd.f32 %v122, %v140
    %144 = vst [vmem:[#allocation8] sm:$0xff] %v142
    %145 = vst [vmem:[#allocation8 + $0x8] sm:$0xff] %v143
    // Predicated region
    $region26: #{tpu_custom_call.1} parent=1 // pred_check
      _
    $region27: #{tpu_custom_call.1} parent=1 // pred_check_branch
      %147 = sbr.rel (0) target = $region29
    $region28: #{tpu_custom_call.1} parent=1 // pred_region
      %s149 = ssub.s32 256, 256
      %150 = vsyncadd [#allocation4], %s149
      %s151 = sshll.u32 [#allocation7], 4
      %s152 = int_to_ptr.vmem [resolvable:$true] %s151
      %157 = dma.vmem_to_hbm [thread:$0]  %s152, 256, %s4, [#allocation4], 128, 128, 8
    $region29: #{tpu_custom_call.1} parent=1 // pred_fallthru
      _
    // Predicated region
    $region30: #{tpu_custom_call.1} parent=1 // pred_check
      _
    $region31: #{tpu_custom_call.1} parent=1 // pred_check_branch
      %159 = sbr.rel (0) target = $region33
    $region32: #{tpu_custom_call.1} parent=1 // pred_region
      %s161 = ssub.s32 256, 256
      %162 = vsyncadd [#allocation9], %s161
      %s163 = sshll.u32 [#allocation8], 4
      %s164 = int_to_ptr.vmem [resolvable:$true] %s163
      %169 = dma.vmem_to_hbm [thread:$0]  %s164, 256, %s5, [#allocation9], 128, 128, 8
    $region33: #{tpu_custom_call.1} parent=1 // pred_fallthru
      _
    // Predicated region
    $region34: #{tpu_custom_call.1} parent=1 // pred_check
      _
    $region35: #{tpu_custom_call.1} parent=1 // pred_check_branch
      %171 = sbr.rel (0) target = $region37
    $region36: #{tpu_custom_call.1} parent=1 // pred_region
      %172 = dma.done [#allocation4], 256
    $region37: #{tpu_custom_call.1} parent=1 // pred_fallthru
      _
    // Predicated region
    $region38: #{tpu_custom_call.1} parent=1 // pred_check
      _
    $region39: #{tpu_custom_call.1} parent=1 // pred_check_branch
      %174 = sbr.rel (0) target = $region41
    $region40: #{tpu_custom_call.1} parent=1 // pred_region
      %175 = dma.done [#allocation9], 256
    $region41: #{tpu_custom_call.1} parent=1 // pred_fallthru
      _
    %176 = vsyncpa [#allocation3], 1
    %177 = vsyncpa [#allocation6], 1
    %178 = vsyncpa [#allocation4], 1
    %179 = vsyncpa [#allocation9], 1

</llo_original>
